<compile_context>
chip_gen: v7x
topology: tpu7x:2x2x1
jax: 0.10.0
libtpu: 0.0.40
codegen_flags: <defaults>
</compile_context>

<pallas_src>
import functools

import jax
import jax.numpy as jnp
import numpy as np
from jax import lax
from jax.experimental import pallas as pl
from jax.experimental.pallas import tpu as pltpu


def _ce_sum_kernel(logits_ref, tgt_ref, out_ref, acc_ref, *,
                   tile_m, num_rows, blocks_per_split, first_edge_blk,
                   has_edge):
    c = pl.program_id(0)   # split axis (CORE_PARALLEL when num_splits > 1)
    i = pl.program_id(1)   # row-tile axis (reduction, "arbitrary")

    @pl.when(i == 0)
    def _init():
        acc_ref[...] = jnp.zeros_like(acc_ref)

    x = logits_ref[...].astype(jnp.float32)            # (tile_m, C)
    t = tgt_ref[...]                                   # (tile_m, 1) int32

    # Numerically-stable log-softmax pieces, computed on shifted logits.
    m = jnp.max(x, axis=-1, keepdims=True)             # (tile_m, 1)
    xs = x - m
    lse = jnp.log(jnp.sum(jnp.exp(xs), axis=-1, keepdims=True))  # logsumexp - m
    # Column ids built once per step as (1, C); broadcasting handles the rest.
    col = lax.broadcasted_iota(jnp.int32, (1, xs.shape[-1]), 1)
    # Target gather via one-hot select (no dynamic gather on TPU); the -1
    # sentinel (dropped last time-step of each sequence) matches no column.
    tgt_logit = jnp.sum(jnp.where(col == t, xs, 0.0), axis=-1, keepdims=True)
    per_row = lse - tgt_logit                          # = logsumexp(x) - x[t]

    valid_t = t >= 0

    if not has_edge:
        # All blocks are full and in-bounds: sentinel mask only.
        # NOTE: keep this a select (jnp.where), never mask*per_row — garbage
        # rows of edge blocks may be NaN/Inf and must be discarded, not
        # multiplied.
        acc_ref[...] = acc_ref[...] + jnp.where(valid_t, per_row, 0.0)
    else:
        blk = c * blocks_per_split + i                 # UNclamped block id

        @pl.when(blk < first_edge_blk)
        def _interior():
            acc_ref[...] = acc_ref[...] + jnp.where(valid_t, per_row, 0.0)

        @pl.when(blk >= first_edge_blk)
        def _edge():
            # Ragged last block / clamped overflow blocks: also drop rows past
            # the flattened array end.
            row = blk * tile_m + lax.broadcasted_iota(jnp.int32, (tile_m, 1), 0)
            valid = valid_t & (row < num_rows)
            acc_ref[...] = acc_ref[...] + jnp.where(valid, per_row, 0.0)

    @pl.when(i == pl.num_programs(1) - 1)
    def _finalize():
        total = jnp.sum(acc_ref[...])                  # single final reduce
        out_ref[...] = jnp.broadcast_to(total, out_ref.shape)


def attention_loss(predicts_res, labels, *, num_splits=1,
                   vmem_working_set=20 * 1024 * 1024):
    """predicts_res: [N, T, C] float logits; labels: [N, T] integer ids.

    Set num_splits=2 on v7x (2 TensorCores/chip) to shard the row range across
    cores with CORE_PARALLEL; on single-core chips (v5e/v6e) leave it at 1.
    """
    assert labels.ndim == predicts_res.ndim - 1, \
        "The target's shape and inputs's shape is [N, d] and [N, num_steps]"
    N, T, C = predicts_res.shape

    # Flatten WITHOUT the [:, :-1] slice (contiguous reshape -> free, no extra
    # HBM copy of the logits).
    logits = predicts_res.reshape(N * T, C)
    # Shifted targets: row (n, t) pairs with labels[n, t+1]; the last step of
    # each sequence gets the -1 sentinel and is dropped in-kernel.
    targets = jnp.concatenate(
        [labels[:, 1:].astype(jnp.int32),
         jnp.full((N, 1), -1, dtype=jnp.int32)], axis=1).reshape(N * T, 1)

    M = N * T
    itemsize = jnp.dtype(logits.dtype).itemsize
    # Sublane-packing alignment: 8 rows for f32, 16 for bf16, 32 for 8-bit.
    align = 8 * max(1, 4 // itemsize)

    # Byte-targeted tile size.  Per-row VMEM footprint accounts for the
    # pipelined logits buffers, the 128-lane padding of the (tile_m,1) int32
    # targets (512 B/row, double-buffered) and f32 accumulator, plus headroom
    # for two full-tile f32 compiler temporaries (xs / exp(xs)).
    n_log_bufs = 3
    n_f32_tmp = 2
    per_row_bytes = (n_log_bufs * C * itemsize
                     + 2 * 512            # targets, lane-padded, x2 buffers
                     + 512                # accumulator, lane-padded
                     + n_f32_tmp * C * 4)
    tile_m = (vmem_working_set // per_row_bytes) // align * align
    rows_padded = ((M + align - 1) // align) * align
    tile_m = int(max(align, min(tile_m, rows_padded)))

    total_blocks = int(pl.cdiv(M, tile_m))
    num_splits = int(num_splits) if total_blocks >= int(num_splits) else 1
    blocks_per_split = int(pl.cdiv(total_blocks, num_splits))
    needs_clamp = num_splits * blocks_per_split > total_blocks

    ragged = (M % tile_m) != 0
    first_edge_blk = (M // tile_m) if ragged else total_blocks
    has_edge = first_edge_blk < num_splits * blocks_per_split

    def in_map(c, i):
        blk = c * blocks_per_split + i
        if needs_clamp:
            # Overflow iterations of the last split re-read the last real
            # block; their rows are masked out in-kernel (row >= num_rows).
            blk = jnp.minimum(blk, total_blocks - 1)
        return (blk, 0)

    # Logits stream: 3-deep pipelining hides per-step overhead of the smaller
    # byte-sized tiles (only worthwhile with enough blocks per split).
    logits_spec = pl.BlockSpec((tile_m, C), in_map)
    if blocks_per_split >= n_log_bufs:
        try:
            logits_spec = pl.BlockSpec((tile_m, C), in_map,
                                       pipeline_mode=pl.Buffered(n_log_bufs))
        except Exception:
            pass  # older API without pipeline_mode: fall back to 2 buffers

    kernel = functools.partial(
        _ce_sum_kernel, tile_m=tile_m, num_rows=M,
        blocks_per_split=blocks_per_split, first_edge_blk=first_edge_blk,
        has_edge=has_edge)

    # Scoped-VMEM limit from the actual working set (incl. lane padding and
    # f32 temporaries) + margin; stays <= 32 MiB so it is safe on v7x's
    # 64 MiB VMEM as well as v5e/v6e.
    vmem_need = (tile_m * per_row_bytes
                 + num_splits * 8 * 128 * 4 * 2
                 + (4 << 20))
    vmem_limit = int(min(max(vmem_need, 16 << 20), 32 << 20))

    if num_splits > 1:
        # Real 2-TensorCore shard (v7x): only CORE_PARALLEL changes codegen.
        dim_sems = (pltpu.CORE_PARALLEL, pltpu.ARBITRARY)
    else:
        dim_sems = ("arbitrary", "arbitrary")

    cost = pl.CostEstimate(
        flops=int(7 * M * C),
        transcendentals=int(M * C),
        bytes_accessed=int(M * C * itemsize + 4 * M + num_splits * 8 * 128 * 4))

    partials = pl.pallas_call(
        kernel,
        out_shape=jax.ShapeDtypeStruct((num_splits, 8, 128), jnp.float32),
        grid_spec=pltpu.PrefetchScalarGridSpec(
            num_scalar_prefetch=0,
            grid=(num_splits, blocks_per_split),
            in_specs=[
                logits_spec,
                pl.BlockSpec((tile_m, 1), in_map),
            ],
            out_specs=pl.BlockSpec((1, 8, 128), lambda c, i: (c, 0, 0)),
            scratch_shapes=[pltpu.VMEM((tile_m, 1), jnp.float32)],
        ),
        compiler_params=pltpu.CompilerParams(
            dimension_semantics=dim_sems,
            vmem_limit_bytes=vmem_limit),
        cost_estimate=cost,
    )(logits, targets)

    # One trivial sum over the per-split partials (num_splits <= 2).
    return {"loss": jnp.sum(partials[:, 0, 0])}


def _reference_loss(predicts_res, labels):
    # pure-JAX reference mirroring torch.nn.CrossEntropyLoss(reduction='none').sum()
    pred = predicts_res[:, :-1]
    tgt = labels[:, 1:].astype(jnp.int32)
    C = pred.shape[-1]
    logits = pred.reshape(-1, C).astype(jnp.float32)
    targets = tgt.reshape(-1)
    logz = jax.scipy.special.logsumexp(logits, axis=-1)
    tgt_logit = jnp.take_along_axis(logits, targets[:, None], axis=-1)[:, 0]
    return jnp.sum(logz - tgt_logit)


if __name__ == "__main__":
    key = jax.random.PRNGKey(0)
    N, T, C = 2, 8, 32   # batch, num_steps, num_classes
    k1, k2 = jax.random.split(key)
    predicts_res = jax.random.normal(k1, (N, T, C), dtype=jnp.float32)
    labels = jax.random.randint(k2, (N, T), 0, C, dtype=jnp.int32)

    result = attention_loss(predicts_res, labels)
    loss = jax.block_until_ready(result["loss"])

    ref = jax.block_until_ready(_reference_loss(predicts_res, labels))
    np.testing.assert_allclose(np.asarray(loss), np.asarray(ref),
                               rtol=1e-5, atol=1e-5)
    print("KERNEL_OK")
</pallas_src>

<mosaic_0001>
module attributes {stable_mosaic.version = 11 : i64} {
  func.func @_ce_sum_kernel(%arg0: i32, %arg1: i32, %arg2: memref<16x32xf32, #tpu.memory_space<vmem>>, %arg3: memref<16x1xi32, #tpu.memory_space<vmem>>, %arg4: memref<1x8x128xf32, #tpu.memory_space<vmem>>, %arg5: memref<16x1xf32, #tpu.memory_space<vmem>>) attributes {dimension_semantics = [#tpu.dimension_semantics<arbitrary>, #tpu.dimension_semantics<arbitrary>], iteration_bounds = array<i64: 1, 1>, scalar_prefetch = 0 : i64, scratch_operands = 1 : i64, tpu.core_type = #tpu.core_type<tc>, window_params = [{transform_indices = @transform_0, window_bounds = array<i64: 16, 32>}, {transform_indices = @transform_1, window_bounds = array<i64: 16, 1>}, {transform_indices = @transform_2, window_bounds = array<i64: 1, 8, 128>}]} {
    %c0_i32 = arith.constant 0 : i32
    %0 = arith.cmpi eq, %arg1, %c0_i32 : i32
    %1 = arith.extui %0 : i1 to i32
    %c0_i32_0 = arith.constant 0 : i32
    %2 = arith.cmpi ne, %1, %c0_i32_0 : i32
    scf.if %2 {
      %cst_15 = arith.constant 0.000000e+00 : f32
      %32 = vector.broadcast %cst_15 : f32 to vector<16x1xf32>
      %c0_16 = arith.constant 0 : index
      %c0_17 = arith.constant 0 : index
      %33 = vector.load %arg5[%c0_16, %c0_17] : memref<16x1xf32, #tpu.memory_space<vmem>>, vector<16x1xf32>
      tpu.vector_store %arg5[%c0_16, %c0_17], %32 {strides = array<i32>} : memref<16x1xf32, #tpu.memory_space<vmem>>, vector<16x1xf32>,
    } else {
    }
    %c0 = arith.constant 0 : index
    %c0_1 = arith.constant 0 : index
    %3 = vector.load %arg2[%c0, %c0_1] : memref<16x32xf32, #tpu.memory_space<vmem>>, vector<16x32xf32>
    %c0_2 = arith.constant 0 : index
    %c0_3 = arith.constant 0 : index
    %4 = vector.load %arg3[%c0_2, %c0_3] : memref<16x1xi32, #tpu.memory_space<vmem>>, vector<16x1xi32>
    %cst = arith.constant dense<0xFF800000> : vector<16xf32>
    %5 = vector.multi_reduction <maximumf>, %3, %cst [1] : vector<16x32xf32> to vector<16xf32>
    %6 = vector.shape_cast %5 : vector<16xf32> to vector<16x1xf32>
    %7 = vector.broadcast %6 : vector<16x1xf32> to vector<16x32xf32>
    %8 = arith.subf %3, %7 : vector<16x32xf32>
    %9 = math.exp %8 : vector<16x32xf32>
    %cst_4 = arith.constant dense<0.000000e+00> : vector<16xf32>
    %10 = vector.multi_reduction <add>, %9, %cst_4 [1] : vector<16x32xf32> to vector<16xf32>
    %11 = vector.shape_cast %10 : vector<16xf32> to vector<16x1xf32>
    %12 = math.log %11 : vector<16x1xf32>
    %13 = tpu.iota {dimensions = array<i32: 1>} : vector<1x32xi32>
    %14 = vector.broadcast %13 : vector<1x32xi32> to vector<16x32xi32>
    %15 = vector.broadcast %4 : vector<16x1xi32> to vector<16x32xi32>
    %16 = arith.cmpi eq, %14, %15 : vector<16x32xi32>
    %cst_5 = arith.constant 0.000000e+00 : f32
    %17 = vector.broadcast %cst_5 : f32 to vector<16x32xf32>
    %18 = arith.select %16, %8, %17 : vector<16x32xi1>, vector<16x32xf32>
    %cst_6 = arith.constant dense<0.000000e+00> : vector<16xf32>
    %19 = vector.multi_reduction <add>, %18, %cst_6 [1] : vector<16x32xf32> to vector<16xf32>
    %20 = vector.shape_cast %19 : vector<16xf32> to vector<16x1xf32>
    %21 = arith.subf %12, %20 : vector<16x1xf32>
    %c0_i32_7 = arith.constant 0 : i32
    %22 = vector.broadcast %c0_i32_7 : i32 to vector<16x1xi32>
    %23 = arith.cmpi sge, %4, %22 : vector<16x1xi32>
    %c0_8 = arith.constant 0 : index
    %c0_9 = arith.constant 0 : index
    %24 = vector.load %arg5[%c0_8, %c0_9] : memref<16x1xf32, #tpu.memory_space<vmem>>, vector<16x1xf32>
    %cst_10 = arith.constant 0.000000e+00 : f32
    %25 = vector.broadcast %cst_10 : f32 to vector<16x1xf32>
    %26 = arith.select %23, %21, %25 : vector<16x1xi1>, vector<16x1xf32>
    %27 = arith.addf %24, %26 : vector<16x1xf32>
    %c0_11 = arith.constant 0 : index
    %c0_12 = arith.constant 0 : index
    %28 = vector.load %arg5[%c0_11, %c0_12] : memref<16x1xf32, #tpu.memory_space<vmem>>, vector<16x1xf32>
    tpu.vector_store %arg5[%c0_11, %c0_12], %27 {strides = array<i32>} : memref<16x1xf32, #tpu.memory_space<vmem>>, vector<16x1xf32>,
    %c0_i32_13 = arith.constant 0 : i32
    %29 = arith.cmpi eq, %arg1, %c0_i32_13 : i32
    %30 = arith.extui %29 : i1 to i32
    %c0_i32_14 = arith.constant 0 : i32
    %31 = arith.cmpi ne, %30, %c0_i32_14 : i32
    scf.if %31 {
      %c0_15 = arith.constant 0 : index
      %c0_16 = arith.constant 0 : index
      %32 = vector.load %arg5[%c0_15, %c0_16] : memref<16x1xf32, #tpu.memory_space<vmem>>, vector<16x1xf32>
      %33 = vector.shape_cast %32 : vector<16x1xf32> to vector<1x16x1xf32>
      %cst_17 = arith.constant dense<0.000000e+00> : vector<1xf32>
      %34 = vector.multi_reduction <add>, %33, %cst_17 [1, 2] : vector<1x16x1xf32> to vector<1xf32>
      %35 = vector.shape_cast %34 : vector<1xf32> to vector<1x1x1xf32>
      %36 = vector.extract %35[0, 0, 0] : f32 from vector<1x1x1xf32>
      %37 = vector.broadcast %36 : f32 to vector<1x8x128xf32>
      %c0_18 = arith.constant 0 : index
      %c0_19 = arith.constant 0 : index
      %c0_20 = arith.constant 0 : index
      %38 = vector.load %arg4[%c0_18, %c0_19, %c0_20] : memref<1x8x128xf32, #tpu.memory_space<vmem>>, vector<1x8x128xf32>
      tpu.vector_store %arg4[%c0_18, %c0_19, %c0_20], %37 {strides = array<i32>} : memref<1x8x128xf32, #tpu.memory_space<vmem>>, vector<1x8x128xf32>,
    } else {
    }
    return
  }
  func.func @transform_0(%arg0: i32, %arg1: i32) -> (i32, i32) {
    %c1_i32 = arith.constant 1 : i32
    %0 = arith.muli %arg0, %c1_i32 : i32
    %1 = arith.addi %0, %arg1 : i32
    %c0_i32 = arith.constant 0 : i32
    %c0_i32_0 = arith.constant 0 : i32
    return %1, %c0_i32 : i32, i32
  }
  func.func @transform_1(%arg0: i32, %arg1: i32) -> (i32, i32) {
    %c1_i32 = arith.constant 1 : i32
    %0 = arith.muli %arg0, %c1_i32 : i32
    %1 = arith.addi %0, %arg1 : i32
    %c0_i32 = arith.constant 0 : i32
    %c0_i32_0 = arith.constant 0 : i32
    return %1, %c0_i32 : i32, i32
  }
  func.func @transform_2(%arg0: i32, %arg1: i32) -> (i32, i32, i32) {
    %c0_i32 = arith.constant 0 : i32
    %c0_i32_0 = arith.constant 0 : i32
    %c0_i32_1 = arith.constant 0 : i32
    return %arg0, %c0_i32, %c0_i32_0 : i32, i32, i32
  }
}

</mosaic_0001>

<llo_original>
// kernel: tpu_custom_call.1
$region0: #{tpu_custom_call.1}
  #allocation0 [shape = 'u32[]', space=smem, size = 0x4, offset = 0x4, fixed_abs, tag = 'smem constant byte address 0x4 - core index']
  #allocation1 [shape = 'u32[144,128]{1,0:T(1,128)}', space=vmem, size = 0x12000, scoped, tag = 'internal scratch']
  #allocation2 [shape = 'f32[16,1]{1,0:T(8,128)}', space=vmem, size = 0x2000, scoped, tag = 'scratch operand']
  %s0 = inlined_call_operand.vmem [shape: f32[16,32], index: 0, kind: input, shape index: {}]
  %s1 = inlined_call_operand.vmem [shape: s32[16,1], index: 1, kind: input, shape index: {}]
  %s2 = inlined_call_operand.hbm [shape: f32[1,8,128], index: 2, kind: output, shape index: {}]
  %s3 = sld [smem:[#allocation0]]
  $region26: #{tpu_custom_call.1} parent=0
    _
  %s5 = ssub.s32 1, %s3
  %s6 = scalar_select 0, %s5, %s3
  $region1: #{tpu_custom_call.1} parent=0
    #allocation3 [shape = 'u8[4096]{0}', space=vmem, size = 0x1000, scoped, tag = 'output window, operand 0, single buffered']
    #allocation4 [shape = 's32[1]{0}', space=sflag, size = 0x4, scoped, tag = 'scoped memory for tpu_custom_call.1']
    %7 = vsyncpa [#allocation4], 0
    // Predicated region
    $region2: #{tpu_custom_call.1} parent=1 // pred_check
      _
    $region3: #{tpu_custom_call.1} parent=1 // pred_check_branch
      %9 = sbr.rel (0) target = $region5
    $region4: #{tpu_custom_call.1} parent=1 // pred_region
      %s10 = sadd.s32 0, 0
      %s11 = smul.u32 2, %s10
      %p12 = scmp.lt.s32.totalorder %s11, 1
      %s13 = scalar_select %p12, %s11, 1
      %s14 = smul.addr %s13, 8
      %s15 = scalar_lea.vmem %s0, %s14
      %s16 = sadd.s32 0, 0
      %s17 = smul.u32 2, %s16
    $region5: #{tpu_custom_call.1} parent=1 // pred_fallthru
      _
    // Predicated region
    $region6: #{tpu_custom_call.1} parent=1 // pred_check
      _
    $region7: #{tpu_custom_call.1} parent=1 // pred_check_branch
      %19 = sbr.rel (0) target = $region9
    $region8: #{tpu_custom_call.1} parent=1 // pred_region
      %s20 = sadd.s32 0, 0
      %s21 = smul.u32 2, %s20
      %p22 = scmp.lt.s32.totalorder %s21, 1
      %s23 = scalar_select %p22, %s21, 1
      %s24 = smul.addr %s23, 8
      %s25 = scalar_lea.vmem %s1, %s24
      %s26 = sadd.s32 0, 0
      %s27 = smul.u32 2, %s26
    $region9: #{tpu_custom_call.1} parent=1 // pred_fallthru
      _
    %s28 = sadd.s32 0, 0
    %s29 = smul.u32 2, %s28
    %p30 = scmp.lt.s32.totalorder %s29, 1
    %s31 = scalar_select %p30, %s29, 1
    %s32 = smul.addr %s31, 8
    %s33 = scalar_lea.vmem %s0, %s32
    %s34 = sadd.s32 0, 0
    %s35 = smul.u32 2, %s34
    %p36 = scmp.lt.s32.totalorder %s35, 1
    %s37 = scalar_select %p36, %s35, 1
    %s38 = smul.addr %s37, 8
    %s39 = scalar_lea.vmem %s1, %s38
    %s40 = sadd.s32 0, 0
    %s41 = smul.u32 2, %s40
    %p42 = scmp.lt.s32.totalorder %s41, 1
    %s43 = scalar_select %p42, %s41, 1
    %s44 = smul.addr %s43, 8
    %s45 = scalar_lea.vmem %s0, %s44
    %s46 = sadd.s32 0, 0
    %s47 = smul.u32 2, %s46
    %s48 = sadd.s32 0, 0
    %s49 = smul.u32 2, %s48
    %p50 = scmp.lt.s32.totalorder %s49, 1
    %s51 = scalar_select %p50, %s49, 1
    %s52 = smul.addr %s51, 8
    %s53 = scalar_lea.vmem %s1, %s52
    %s54 = sadd.s32 0, 0
    %s55 = smul.u32 2, %s54
    %p56 = scmp.eq.s32.totalorder 0, 0
    // Predicated region
    $region10: #{tpu_custom_call.1} parent=1 // pred_check
      %p57 = pneg %p56
    $region11: #{tpu_custom_call.1} parent=1 // pred_check_branch
      %59 = sbr.rel (%p57) target = $region13
    $region12: #{tpu_custom_call.1} parent=1 // pred_region
      %vm60 = vcmask 7168
      %61 = vst.msk [vmem:[#allocation2] sm:$0xff] %vm60, 0.0
      %62 = vst.msk [vmem:[#allocation2 + $0x8] sm:$0xff] %vm60, 0.0
    $region13: #{tpu_custom_call.1} parent=1 // pred_fallthru
      _
    %v63 = vld [vmem:[%s45] sm:$0xff]
    %v64 = vld [vmem:[%s45 + $0x8] sm:$0xff]
    %v65 = vld [vmem:[%s53] sm:$0xff]
    %v66 = vld [vmem:[%s53 + $0x8] sm:$0xff]
    %vm67 = vcmask 261120
    %v68 = vsel %vm67, %v63, -inf
    %69 = vmax.xlane.f32.xlu0 %v68
    %v70 = vpop.xlane.xlu0 %69
    %v71 = vsel %vm67, %v64, -inf
    %72 = vmax.xlane.f32.xlu0 %v71
    %v73 = vpop.xlane.xlu0 %72
    %v74 = vsub.f32 %v63, %v70
    %v75 = vsub.f32 %v64, %v73
    %v76 = vmul.f32 %v74, 1.442695
    %v77 = vpow.pop %v76
    %v78 = vmul.f32 %v75, 1.442695
    %v79 = vpow.pop %v78
    %v80 = vsel %vm67, %v77, 0.0
    %81 = vadd.xlane.f32.xlu0 %v80
    %v82 = vpop.xlane.xlu0 %81
    %v83 = vsel %vm67, %v79, 0.0
    %84 = vadd.xlane.f32.xlu0 %v83
    %v85 = vpop.xlane.xlu0 %84
    %v86 = vlog2.pop %v82
    %v87 = vmul.f32 %v86, 0.6931472
    %v88 = vlog2.pop %v85
    %v89 = vmul.f32 %v88, 0.6931472
    %v90 = vlaneseq
    %v91 = vand.u32 %v90, 127
    %92 = vset.pattern.permute.xlu0 0
    %93 = vperm.xlu0 %92, %v65
    %v94 = vpop.permute.xlu0 %93
    %95 = vset.pattern.permute.xlu0 0
    %96 = vperm.xlu0 %95, %v66
    %v97 = vpop.permute.xlu0 %96
    %vm98 = vcmp.eq.s32.totalorder %v91, %v94
    %vm99 = vcmp.eq.s32.totalorder %v91, %v97
    %v100 = vsel %vm98, %v74, 0.0
    %v101 = vsel %vm99, %v75, 0.0
    %v102 = vsel %vm67, %v100, 0.0
    %103 = vadd.xlane.f32.xlu0 %v102
    %v104 = vpop.xlane.xlu0 %103
    %v105 = vsel %vm67, %v101, 0.0
    %106 = vadd.xlane.f32.xlu0 %v105
    %v107 = vpop.xlane.xlu0 %106
    %v108 = vsub.f32 %v87, %v104
    %v109 = vsub.f32 %v89, %v107
    %vm110 = vcmp.ge.s32.totalorder %v65, 0
    %vm111 = vcmp.ge.s32.totalorder %v66, 0
    %v112 = vld [vmem:[#allocation2] sm:$0xff]
    %v113 = vld [vmem:[#allocation2 + $0x8] sm:$0xff]
    %v114 = vsel %vm110, %v108, 0.0
    %v115 = vsel %vm111, %v109, 0.0
    %v116 = vadd.f32 %v112, %v114
    %v117 = vadd.f32 %v113, %v115
    %vm118 = vcmask 7168
    %119 = vst.msk [vmem:[#allocation2] sm:$0xff] %vm118, %v116
    %120 = vst.msk [vmem:[#allocation2 + $0x8] sm:$0xff] %vm118, %v117
    // Predicated region
    $region14: #{tpu_custom_call.1} parent=1 // pred_check
      %p121 = pneg %p56
    $region15: #{tpu_custom_call.1} parent=1 // pred_check_branch
      %123 = sbr.rel (%p121) target = $region17
    $region16: #{tpu_custom_call.1} parent=1 // pred_region
      %v124 = vld [vmem:[#allocation2] sm:$0xff]
      %v125 = vld [vmem:[#allocation2 + $0x8] sm:$0xff]
      %v126 = vsel %vm118, %v124, 0.0
      %v127 = vsel %vm118, %v125, 0.0
      %v128 = vadd.f32 %v126, %v127
      %129 = vadd.xlane.f32.xlu0 %v128
      %v130 = vpop.xlane.xlu0 %129
      %v131 = vrot.slane %v130, 4
      %v132 = vadd.f32 %v130, %v131
      %v133 = vrot.slane %v132, 2
      %v134 = vadd.f32 %v132, %v133
      %v135 = vrot.slane %v134, 1
      %v136 = vadd.f32 %v134, %v135
      %s137 = vtos %v136
      %v138 = vstv %s137
      %139 = vst [vmem:[#allocation3] sm:$0xff] %v138
    $region17: #{tpu_custom_call.1} parent=1 // pred_fallthru
      _
    // Predicated region
    $region18: #{tpu_custom_call.1} parent=1 // pred_check
      _
    $region19: #{tpu_custom_call.1} parent=1 // pred_check_branch
      %141 = sbr.rel (0) target = $region21
    $region20: #{tpu_custom_call.1} parent=1 // pred_region
      %s143 = ssub.s32 128, 128
      %144 = vsyncadd [#allocation4], %s143
      %s146 = sshll.u32 [#allocation3], 4
      %s147 = int_to_ptr.vmem [resolvable:$true] %s146
      %149 = dma.vmem_to_hbm [thread:$0]  %s147, 128, %s2, [#allocation4]
    $region21: #{tpu_custom_call.1} parent=1 // pred_fallthru
      _
    // Predicated region
    $region22: #{tpu_custom_call.1} parent=1 // pred_check
      _
    $region23: #{tpu_custom_call.1} parent=1 // pred_check_branch
      %151 = sbr.rel (0) target = $region25
    $region24: #{tpu_custom_call.1} parent=1 // pred_region
      %152 = dma.done [#allocation4], 128
    $region25: #{tpu_custom_call.1} parent=1 // pred_fallthru
      _
    %153 = vsyncpa [#allocation4], 1

</llo_original>
